<compile_context>
chip_gen: v7x
topology: tpu7x:2x2x1
jax: 0.10.0
libtpu: 0.0.40
codegen_flags: <defaults>
</compile_context>

<pallas_src>
import functools

import jax
import jax.numpy as jnp
from jax.experimental import pallas as pl
from jax.experimental.pallas import tpu as pltpu


def _round_up(x, m):
    return ((x + m - 1) // m) * m


def _pick_tile(dim, candidates):
    """Largest candidate tile that evenly divides `dim` (dim % 128 == 0)."""
    for t in candidates:
        if dim % t == 0:
            return t
    return 128


# ---------------------------------------------------------------------------
# Fused single-kernel path: grid = (2 phases, Np // tn node tiles)
# ---------------------------------------------------------------------------
def _fused_kernel(adj_ref, embt_ref, o_ref, tt_ref, ttb_ref, *,
                  leaky, apply_act):
    phase = pl.program_id(0)   # 0: accumulate Tt = embs.T @ adj, 1: emit out
    n = pl.program_id(1)

    @pl.when(jnp.logical_and(phase == 0, n == 0))
    def _():
        tt_ref[...] = jnp.zeros_like(tt_ref)

    @pl.when(phase == 0)
    def _():
        # Tt (D, E) += embs_t_tile (D, tn) @ adj_tile (tn, E)   [standard MXU]
        tt_ref[...] += jnp.dot(embt_ref[...], adj_ref[...],
                               preferred_element_type=jnp.float32)

    @pl.when(jnp.logical_and(phase == 1, n == 0))
    def _():
        # Stage a bf16 copy once so the per-tile matmuls stay native bf16.
        ttb_ref[...] = tt_ref[...].astype(ttb_ref.dtype)

    @pl.when(phase == 1)
    def _():
        # out_tile (tn, D) = adj_tile (tn, E) @ Tt.T  -> rhs-transposed matmul
        r = jax.lax.dot_general(
            adj_ref[...], ttb_ref[...],
            dimension_numbers=(((1,), (1,)), ((), ())),
            preferred_element_type=jnp.float32)
        if apply_act:
            r = jnp.where(r >= 0, r, jnp.float32(leaky) * r)
        o_ref[...] = r.astype(o_ref.dtype)


def _fused_vmem_bytes(tn, Ep, Dp):
    return (2 * tn * Ep * 2      # adj tiles   (bf16, double-buffered)
            + 2 * Dp * tn * 2    # embs.T tiles
            + 2 * tn * Dp * 4    # out tiles   (f32)
            + Dp * Ep * 4        # f32 Tt accumulator
            + Dp * Ep * 2)       # bf16 staged Tt copy


def _fused_hgcn(adj_b, embs_t, *, leaky, apply_act, tn):
    Np, Ep = adj_b.shape
    Dp, _ = embs_t.shape
    kern = functools.partial(_fused_kernel, leaky=leaky, apply_act=apply_act)
    return pl.pallas_call(
        kern,
        out_shape=jax.ShapeDtypeStruct((Np, Dp), jnp.float32),
        grid_spec=pltpu.PrefetchScalarGridSpec(
            num_scalar_prefetch=0,
            grid=(2, Np // tn),
            in_specs=[
                # adj node tiles, streamed in both phases.
                pl.BlockSpec((tn, Ep), lambda p, n: (n, 0)),
                # embs.T tiles, consumed in phase 0; pinned to block 0 in
                # phase 1 so the pipeline stops streaming it.
                pl.BlockSpec((Dp, tn), lambda p, n: (0, n * (1 - p))),
            ],
            # Output is only produced in phase 1; pin to block 0 during
            # phase 0 (never written there, so nothing stale is flushed).
            out_specs=pl.BlockSpec((tn, Dp), lambda p, n: (n * p, 0)),
            scratch_shapes=[pltpu.VMEM((Dp, Ep), jnp.float32),
                            pltpu.VMEM((Dp, Ep), jnp.bfloat16)],
        ),
        compiler_params=pltpu.CompilerParams(
            dimension_semantics=("arbitrary", "arbitrary"),
            vmem_limit_bytes=30 * 1024 * 1024),
    )(adj_b, embs_t)


# ---------------------------------------------------------------------------
# Fallback: generic tiled accumulator matmul  O = [LeakyReLU](A @ B[.T])
#   grid = (M//tm, N//tn, K//tk), reduction axis last, f32 VMEM accumulator.
# ---------------------------------------------------------------------------
def _matmul_kernel(a_ref, b_ref, o_ref, acc_ref, *, leaky, apply_act, rhs_t):
    @pl.when(pl.program_id(2) == 0)
    def _():
        acc_ref[...] = jnp.zeros_like(acc_ref)

    if rhs_t:
        acc_ref[...] += jax.lax.dot_general(
            a_ref[...], b_ref[...],
            dimension_numbers=(((1,), (1,)), ((), ())),
            preferred_element_type=jnp.float32)
    else:
        acc_ref[...] += jnp.dot(a_ref[...], b_ref[...],
                                preferred_element_type=jnp.float32)

    @pl.when(pl.program_id(2) == pl.num_programs(2) - 1)
    def _():
        r = acc_ref[...]
        if apply_act:
            r = jnp.where(r >= 0, r, jnp.float32(leaky) * r)
        o_ref[...] = r.astype(o_ref.dtype)


def _tiled_matmul(a, b, *, out_dtype, leaky=0.2, apply_act=False, rhs_t=False):
    M, K = a.shape
    if rhs_t:
        N, Kb = b.shape     # b is (N, K); contraction over its last dim
    else:
        Kb, N = b.shape
    assert K == Kb, (a.shape, b.shape, rhs_t)

    tm = _pick_tile(M, (512, 256, 128))
    tn = _pick_tile(N, (512, 256, 128))
    tk = _pick_tile(K, (1024, 512, 256, 128))

    # Megacore: keep >= 2 tiles on the parallel row axis when possible.
    if M // tm < 2 and tm > 128 and M % (tm // 2) == 0:
        tm //= 2

    if rhs_t:
        b_spec = pl.BlockSpec((tn, tk), lambda i, j, k: (j, k))
    else:
        b_spec = pl.BlockSpec((tk, tn), lambda i, j, k: (k, j))

    kern = functools.partial(_matmul_kernel, leaky=leaky,
                             apply_act=apply_act, rhs_t=rhs_t)
    return pl.pallas_call(
        kern,
        out_shape=jax.ShapeDtypeStruct((M, N), out_dtype),
        grid_spec=pltpu.PrefetchScalarGridSpec(
            num_scalar_prefetch=0,
            grid=(M // tm, N // tn, K // tk),
            in_specs=[pl.BlockSpec((tm, tk), lambda i, j, k: (i, k)), b_spec],
            out_specs=pl.BlockSpec((tm, tn), lambda i, j, k: (i, j)),
            scratch_shapes=[pltpu.VMEM((tm, tn), jnp.float32)],
        ),
        compiler_params=pltpu.CompilerParams(
            dimension_semantics=("parallel", "parallel", "arbitrary")),
    )(a, b)


# ---------------------------------------------------------------------------
# Public wrapper (forward-pass equivalent of HGCNConv.forward)
# ---------------------------------------------------------------------------
def hgcn_conv(adj, embs, *, leaky=0.2, act=True, force_two_pass=False):
    """Pallas TPU implementation of HGCNConv.forward(adj, embs, act)."""
    N, E = adj.shape
    N2, D = embs.shape
    assert N == N2, (adj.shape, embs.shape)

    # Pad every dim up to a multiple of 128 so every block respects the
    # (8,128) layout constraint; zero padding is exact for both matmuls and
    # LeakyReLU (act(0) = 0 and the pad region is sliced off).
    Np, Ep, Dp = _round_up(N, 128), _round_up(E, 128), _round_up(D, 128)

    # adj is a 0/1 incidence matrix -> exact in bf16 (halves HBM/VMEM traffic
    # of the array that is read twice); embs is rounded to bf16, accumulation
    # stays f32 inside the kernels.
    adj_b = jnp.pad(adj.astype(jnp.bfloat16), ((0, Np - N), (0, Ep - E)))
    embs_b = jnp.pad(embs.astype(jnp.bfloat16), ((0, Np - N), (0, Dp - D)))
    # Only the *small* N x D array is transposed (single cheap XLA pass);
    # adj itself is never transposed or duplicated in HBM.
    embs_t = embs_b.T

    if not force_two_pass:
        tn = None
        for cand in (512, 256, 128):
            if Np % cand == 0 and _fused_vmem_bytes(cand, Ep, Dp) <= 24 << 20:
                tn = cand
                break
        if tn is not None:
            out = _fused_hgcn(adj_b, embs_t, leaky=leaky, apply_act=act, tn=tn)
            return out[:N, :D]

    # Fallback (Tt too big for VMEM): two tiled passes, Tt round-trips HBM
    # as bf16 (D x E, small compared to adj).
    tt = _tiled_matmul(embs_t, adj_b, out_dtype=jnp.bfloat16)          # (D, E)
    out = _tiled_matmul(adj_b, tt, out_dtype=jnp.float32,
                        leaky=leaky, apply_act=act, rhs_t=True)        # (N, D)
    return out[:N, :D]


def _reference(adj, embs, *, leaky=0.2, act=True):
    out = adj @ (adj.T @ embs)
    if act:
        out = jnp.where(out >= 0, out, leaky * out)
    return out


if __name__ == "__main__":
    # deliberately non-multiples of 128 to exercise the padded remainder path
    N, E, D = 300, 200, 96
    leaky = 0.2

    key = jax.random.PRNGKey(0)
    k_adj, k_emb = jax.random.split(key)

    # sparse-like binary incidence matrix, densified (see TODO above)
    adj = (jax.random.uniform(k_adj, (N, E)) < 0.1).astype(jnp.float32)
    embs = jax.random.normal(k_emb, (N, D), dtype=jnp.float32)

    for act_flag in (True, False):
        ref = _reference(adj, embs, leaky=leaky, act=act_flag)
        denom = float(jnp.max(jnp.abs(ref))) + 1e-6
        for force in (False, True):   # exercise fused + two-pass paths
            out = jax.block_until_ready(
                hgcn_conv(adj, embs, leaky=leaky, act=act_flag,
                          force_two_pass=force))
            err = float(jnp.max(jnp.abs(out - ref))) / denom
            if out.shape != ref.shape or err > 2e-2:
                raise AssertionError(
                    f"Pallas HGCNConv mismatch (act={act_flag}, "
                    f"two_pass={force}): rel-max-err={err:.4e}")

    print("KERNEL_OK")
</pallas_src>

<mosaic_0001>
module attributes {stable_mosaic.version = 11 : i64} {
  func.func @_fused_kernel(%arg0: i32, %arg1: i32, %arg2: memref<128x256xbf16, #tpu.memory_space<vmem>>, %arg3: memref<128x128xbf16, #tpu.memory_space<vmem>>, %arg4: memref<128x128xf32, #tpu.memory_space<vmem>>, %arg5: memref<128x256xf32, #tpu.memory_space<vmem>>, %arg6: memref<128x256xbf16, #tpu.memory_space<vmem>>) attributes {dimension_semantics = [#tpu.dimension_semantics<arbitrary>, #tpu.dimension_semantics<arbitrary>], iteration_bounds = array<i64: 2, 3>, scalar_prefetch = 0 : i64, scratch_operands = 2 : i64, tpu.core_type = #tpu.core_type<tc>, window_params = [{transform_indices = @transform_0, window_bounds = array<i64: 128, 256>}, {transform_indices = @transform_1, window_bounds = array<i64: 128, 128>}, {transform_indices = @transform_2, window_bounds = array<i64: 128, 128>}]} {
    %c0_i32 = arith.constant 0 : i32
    %0 = arith.cmpi eq, %arg0, %c0_i32 : i32
    %c0_i32_0 = arith.constant 0 : i32
    %1 = arith.cmpi eq, %arg1, %c0_i32_0 : i32
    %2 = arith.andi %0, %1 : i1
    %3 = arith.extui %2 : i1 to i32
    %c0_i32_1 = arith.constant 0 : i32
    %4 = arith.cmpi ne, %3, %c0_i32_1 : i32
    scf.if %4 {
      %cst = arith.constant 0.000000e+00 : f32
      %16 = vector.broadcast %cst : f32 to vector<128x256xf32>
      %c0 = arith.constant 0 : index
      %c0_8 = arith.constant 0 : index
      %17 = vector.load %arg5[%c0, %c0_8] : memref<128x256xf32, #tpu.memory_space<vmem>>, vector<128x256xf32>
      tpu.vector_store %arg5[%c0, %c0_8], %16 {strides = array<i32>} : memref<128x256xf32, #tpu.memory_space<vmem>>, vector<128x256xf32>,
    } else {
    }
    %c0_i32_2 = arith.constant 0 : i32
    %5 = arith.cmpi eq, %arg0, %c0_i32_2 : i32
    %6 = arith.extui %5 : i1 to i32
    %c0_i32_3 = arith.constant 0 : i32
    %7 = arith.cmpi ne, %6, %c0_i32_3 : i32
    scf.if %7 {
      %c0 = arith.constant 0 : index
      %c0_8 = arith.constant 0 : index
      %16 = vector.load %arg5[%c0, %c0_8] : memref<128x256xf32, #tpu.memory_space<vmem>>, vector<128x256xf32>
      %c0_9 = arith.constant 0 : index
      %c0_10 = arith.constant 0 : index
      %17 = vector.load %arg3[%c0_9, %c0_10] : memref<128x128xbf16, #tpu.memory_space<vmem>>, vector<128x128xbf16>
      %c0_11 = arith.constant 0 : index
      %c0_12 = arith.constant 0 : index
      %18 = vector.load %arg2[%c0_11, %c0_12] : memref<128x256xbf16, #tpu.memory_space<vmem>>, vector<128x256xbf16>
      %cst = arith.constant dense<0.000000e+00> : vector<128x256xf32>
      %19 = tpu.matmul %17, %18, %cst {dimension_numbers = #tpu.dot_dimension_numbers<[1], [0], [0], [1], [0, 0, 1, 1], [], []>} : vector<128x128xbf16>, vector<128x256xbf16>, vector<128x256xf32> -> vector<128x256xf32>
      %20 = arith.addf %16, %19 : vector<128x256xf32>
      %c0_13 = arith.constant 0 : index
      %c0_14 = arith.constant 0 : index
      %21 = vector.load %arg5[%c0_13, %c0_14] : memref<128x256xf32, #tpu.memory_space<vmem>>, vector<128x256xf32>
      tpu.vector_store %arg5[%c0_13, %c0_14], %20 {strides = array<i32>} : memref<128x256xf32, #tpu.memory_space<vmem>>, vector<128x256xf32>,
    } else {
    }
    %c1_i32 = arith.constant 1 : i32
    %8 = arith.cmpi eq, %arg0, %c1_i32 : i32
    %c0_i32_4 = arith.constant 0 : i32
    %9 = arith.cmpi eq, %arg1, %c0_i32_4 : i32
    %10 = arith.andi %8, %9 : i1
    %11 = arith.extui %10 : i1 to i32
    %c0_i32_5 = arith.constant 0 : i32
    %12 = arith.cmpi ne, %11, %c0_i32_5 : i32
    scf.if %12 {
      %c0 = arith.constant 0 : index
      %c0_8 = arith.constant 0 : index
      %16 = vector.load %arg5[%c0, %c0_8] : memref<128x256xf32, #tpu.memory_space<vmem>>, vector<128x256xf32>
      %17 = arith.truncf %16 : vector<128x256xf32> to vector<128x256xbf16>
      %c0_9 = arith.constant 0 : index
      %c0_10 = arith.constant 0 : index
      %18 = vector.load %arg6[%c0_9, %c0_10] : memref<128x256xbf16, #tpu.memory_space<vmem>>, vector<128x256xbf16>
      tpu.vector_store %arg6[%c0_9, %c0_10], %17 {strides = array<i32>} : memref<128x256xbf16, #tpu.memory_space<vmem>>, vector<128x256xbf16>,
    } else {
    }
    %c1_i32_6 = arith.constant 1 : i32
    %13 = arith.cmpi eq, %arg0, %c1_i32_6 : i32
    %14 = arith.extui %13 : i1 to i32
    %c0_i32_7 = arith.constant 0 : i32
    %15 = arith.cmpi ne, %14, %c0_i32_7 : i32
    scf.if %15 {
      %c0 = arith.constant 0 : index
      %c0_8 = arith.constant 0 : index
      %16 = vector.load %arg2[%c0, %c0_8] : memref<128x256xbf16, #tpu.memory_space<vmem>>, vector<128x256xbf16>
      %c0_9 = arith.constant 0 : index
      %c0_10 = arith.constant 0 : index
      %17 = vector.load %arg6[%c0_9, %c0_10] : memref<128x256xbf16, #tpu.memory_space<vmem>>, vector<128x256xbf16>
      %cst = arith.constant dense<0.000000e+00> : vector<128x128xf32>
      %18 = tpu.matmul %16, %17, %cst {dimension_numbers = #tpu.dot_dimension_numbers<[1], [1], [0], [0], [0, 0, 1, 0], [], []>} : vector<128x256xbf16>, vector<128x256xbf16>, vector<128x128xf32> -> vector<128x128xf32>
      %cst_11 = arith.constant 0.000000e+00 : f32
      %19 = vector.broadcast %cst_11 : f32 to vector<128x128xf32>
      %20 = arith.cmpf oge, %18, %19 : vector<128x128xf32>
      %cst_12 = arith.constant 2.000000e-01 : f32
      %21 = vector.broadcast %cst_12 : f32 to vector<128x128xf32>
      %22 = arith.mulf %21, %18 : vector<128x128xf32>
      %23 = arith.select %20, %18, %22 : vector<128x128xi1>, vector<128x128xf32>
      %c0_13 = arith.constant 0 : index
      %c0_14 = arith.constant 0 : index
      %24 = vector.load %arg4[%c0_13, %c0_14] : memref<128x128xf32, #tpu.memory_space<vmem>>, vector<128x128xf32>
      tpu.vector_store %arg4[%c0_13, %c0_14], %23 {strides = array<i32>} : memref<128x128xf32, #tpu.memory_space<vmem>>, vector<128x128xf32>,
    } else {
    }
    return
  }
  func.func @transform_0(%arg0: i32, %arg1: i32) -> (i32, i32) {
    %c0_i32 = arith.constant 0 : i32
    %c0_i32_0 = arith.constant 0 : i32
    return %arg1, %c0_i32 : i32, i32
  }
  func.func @transform_1(%arg0: i32, %arg1: i32) -> (i32, i32) {
    %c1_i32 = arith.constant 1 : i32
    %0 = arith.subi %c1_i32, %arg0 : i32
    %1 = arith.muli %arg1, %0 : i32
    %c0_i32 = arith.constant 0 : i32
    %c0_i32_0 = arith.constant 0 : i32
    return %c0_i32, %1 : i32, i32
  }
  func.func @transform_2(%arg0: i32, %arg1: i32) -> (i32, i32) {
    %0 = arith.muli %arg1, %arg0 : i32
    %c0_i32 = arith.constant 0 : i32
    %c0_i32_0 = arith.constant 0 : i32
    return %0, %c0_i32 : i32, i32
  }
}

</mosaic_0001>

<llo_original>
// kernel: tpu_custom_call.1
$region0: #{tpu_custom_call.1}
  #allocation0 [shape = 'u32[]', space=smem, size = 0x4, offset = 0x4, fixed_abs, tag = 'smem constant byte address 0x4 - core index']
  #allocation1 [shape = 'u32[144,128]{1,0:T(1,128)}', space=vmem, size = 0x12000, scoped, tag = 'internal scratch']
  #allocation2 [shape = 'f32[128,256]{1,0:T(8,128)}', space=vmem, size = 0x20000, scoped, tag = 'scratch operand']
  #allocation3 [shape = 'bf16[128,256]{1,0:T(16,128)(2,1)}', space=vmem, size = 0x10000, scoped, tag = 'scratch operand']
  %s0 = inlined_call_operand.hbm [shape: bf16[384,256], index: 0, kind: input, shape index: {}]
  %s1 = inlined_call_operand.hbm [shape: bf16[128,384], index: 1, kind: input, shape index: {}]
  %s2 = inlined_call_operand.hbm [shape: f32[384,128], index: 2, kind: output, shape index: {}]
  %s3 = sld [smem:[#allocation0]]
  $region65: #{tpu_custom_call.1} parent=0
    _
  %s5 = ssub.s32 1, %s3
  %s6 = scalar_select 0, %s5, %s3
  $region1: #{tpu_custom_call.1} parent=0
    #allocation4 [shape = 'u8[131072]{0}', space=vmem, size = 0x20000, scoped, tag = 'input window, operand 0']
    #allocation5 [shape = 's32[2]{0}', space=sflag, size = 0x8, scoped, tag = 'scoped memory for tpu_custom_call.1']
    #allocation6 [shape = 's32[2]{0}', space=sflag, size = 0x8, scoped, tag = 'scoped memory for tpu_custom_call.1']
    #allocation7 [shape = 'u8[65536]{0}', space=vmem, size = 0x10000, scoped, tag = 'input window, operand 1']
    #allocation8 [shape = 's32[2]{0}', space=sflag, size = 0x8, scoped, tag = 'scoped memory for tpu_custom_call.1']
    #allocation9 [shape = 'u8[131072]{0}', space=vmem, size = 0x20000, scoped, tag = 'output window, operand 0']
    %7 = vsyncpa [#allocation5], 0
    %s8 = scalar_lea.sflag [#allocation5], 1
    %9 = vsyncpa %s8, 0
    %10 = vsyncpa [#allocation8], 0
    %s11 = scalar_lea.sflag [#allocation8], 1
    %12 = vsyncpa %s11, 0
    %13 = vsyncpa [#allocation6], 0
    %s14 = scalar_lea.sflag [#allocation6], 1
    %15 = vsyncpa %s14, 0
    loop: start=0, step=1, limit=8
    $region2: #{tpu_custom_call.1} parent=1 // loop_pre_header
      _
    $region3: #{tpu_custom_call.1} parent=1 // loop_header
      %s17 = sphi 0, %s21
      %p18 = scmp.ge.s32.totalorder %s17, 8
      %s24 = sphi 0, %s36
      %s25 = sphi 0, %s32
      %s26 = sphi 0, %s24
      %s27 = sphi 0, %s25
      %s28 = sphi 0, %s26
      %s29 = sphi 0, %s27
      %s39 = sphi 0, %s41
      %s42 = sphi 0, %s39
      %s43 = sphi 0, %s42
      %s59 = sphi 0, %s43
      %s69 = sphi 0, %s71
      %s72 = sphi 0, %s69
      %s73 = sphi 0, %s72
      %s89 = sphi 0, %s73
      %s97 = sphi 0, %s99
      %s100 = sphi 0, %s97
      %s101 = sphi 0, %s100
      %s117 = sphi 0, %s101
    $region4: #{tpu_custom_call.1} parent=1 // loop_header_branch
      %20 = sbr.rel (%p18) target = $region8
    $region5: #{tpu_custom_call.1} parent=1 // loop_body
      %s22 = ssub.s32 %s17, 1
      %s23 = ssub.s32 %s17, 2
      %s30 = sadd.s32 1, %s25
      %p31 = scmp.ge.s32.totalorder %s30, 3
      %s32 = scalar_select %p31, 0, %s30
      %s33 = sadd.s32 1, %s24
      %s34 = scalar_select %p31, %s33, %s24
      %p35 = scmp.ge.s32.totalorder %s34, 2
      %s36 = scalar_select %p35, 0, %s34
      %s37 = ssub.s32 %s25, %s32
      %p38 = scmp.eq.s32.totalorder %s37, 0
      %s40 = sadd.s32 %s39, 1
      %s41 = scalar_select %p38, %s39, %s40
      %p44 = pneg %p38
      %p45 = scmp.eq.s32.totalorder %s17, 5
      %p46 = por %p44, %p45
      %p47 = scmp.ne.s32.totalorder %s39, %s42
      %p48 = scmp.eq.s32.totalorder %s17, 0
      %p49 = por %p47, %p48
      %p50 = scmp.ne.s32.totalorder %s39, %s42
      %p51 = scmp.eq.s32.totalorder %s22, 5
      %p52 = por %p50, %p51
      %p53 = scmp.ne.s32.totalorder %s42, %s43
      %p54 = scmp.eq.s32.totalorder %s22, 0
      %p55 = por %p53, %p54
      %p56 = scmp.ne.s32.totalorder %s42, %s43
      %p57 = scmp.eq.s32.totalorder %s23, 5
      %p58 = por %p56, %p57
      %p60 = scmp.ne.s32.totalorder %s43, %s59
      %p61 = scmp.eq.s32.totalorder %s23, 0
      %p62 = por %p60, %p61
      %s63 = ssub.s32 1, %s24
      %s64 = smul.u32 %s25, %s63
      %s65 = ssub.s32 1, %s36
      %s66 = smul.u32 %s32, %s65
      %s67 = ssub.s32 %s64, %s66
      %p68 = scmp.eq.s32.totalorder %s67, 0
      %s70 = sadd.s32 %s69, 1
      %s71 = scalar_select %p68, %s69, %s70
      %p74 = pneg %p68
      %p75 = scmp.eq.s32.totalorder %s17, 5
      %p76 = por %p74, %p75
      %p77 = scmp.ne.s32.totalorder %s69, %s72
      %p78 = scmp.eq.s32.totalorder %s17, 0
      %p79 = por %p77, %p78
      %p80 = scmp.ne.s32.totalorder %s69, %s72
      %p81 = scmp.eq.s32.totalorder %s22, 5
      %p82 = por %p80, %p81
      %p83 = scmp.ne.s32.totalorder %s72, %s73
      %p84 = scmp.eq.s32.totalorder %s22, 0
      %p85 = por %p83, %p84
      %p86 = scmp.ne.s32.totalorder %s72, %s73
      %p87 = scmp.eq.s32.totalorder %s23, 5
      %p88 = por %p86, %p87
      %p90 = scmp.ne.s32.totalorder %s73, %s89
      %p91 = scmp.eq.s32.totalorder %s23, 0
      %p92 = por %p90, %p91
      %s93 = smul.u32 %s25, %s24
      %s94 = smul.u32 %s32, %s36
      %s95 = ssub.s32 %s93, %s94
      %p96 = scmp.eq.s32.totalorder %s95, 0
      %s98 = sadd.s32 %s97, 1
      %s99 = scalar_select %p96, %s97, %s98
      %p102 = pneg %p96
      %p103 = scmp.eq.s32.totalorder %s17, 5
      %p104 = por %p102, %p103
      %p105 = scmp.ne.s32.totalorder %s97, %s100
      %p106 = scmp.eq.s32.totalorder %s17, 0
      %p107 = por %p105, %p106
      %p108 = scmp.ne.s32.totalorder %s97, %s100
      %p109 = scmp.eq.s32.totalorder %s22, 5
      %p110 = por %p108, %p109
      %p111 = scmp.ne.s32.totalorder %s100, %s101
      %p112 = scmp.eq.s32.totalorder %s22, 0
      %p113 = por %p111, %p112
      %p114 = scmp.ne.s32.totalorder %s100, %s101
      %p115 = scmp.eq.s32.totalorder %s23, 5
      %p116 = por %p114, %p115
      %p118 = scmp.ne.s32.totalorder %s101, %s117
      %p119 = scmp.eq.s32.totalorder %s23, 0
      %p120 = por %p118, %p119
      %p121 = scmp.le.s32.totalorder 1, %s17
      %p122 = scmp.lt.s32.totalorder %s17, 7
      %p123 = pnand %p121, %p122
      %p124 = pneg %p123
      // Predicated region
      $region9: #{tpu_custom_call.1} parent=5 // pred_check
        _
      $region10: #{tpu_custom_call.1} parent=5 // pred_check_branch
        %126 = sbr.rel (%p123) target = $region12
      $region11: #{tpu_custom_call.1} parent=5 // pred_region
        %s127 = ssub.s32 %s17, 1
      $region12: #{tpu_custom_call.1} parent=5 // pred_fallthru
        _
      %p128 = scmp.lt.s32.totalorder %s17, 6
      // Predicated region
      $region13: #{tpu_custom_call.1} parent=5 // pred_check
        %p129 = pneg %p128
      $region14: #{tpu_custom_call.1} parent=5 // pred_check_branch
        %131 = sbr.rel (%p129) target = $region16
      $region15: #{tpu_custom_call.1} parent=5 // pred_region
        // Predicated region
        $region17: #{tpu_custom_call.1} parent=15 // pred_check
          %p132 = pneg %p49
        $region18: #{tpu_custom_call.1} parent=15 // pred_check_branch
          %134 = sbr.rel (%p132) target = $region20
        $region19: #{tpu_custom_call.1} parent=15 // pred_region
          %s135 = sand.u32 %s39, 1
          %s136 = scalar_lea.sflag [#allocation5], %s135
          %s137 = sand.u32 %s39, 1
          %s138 = smul.addr %s137, 128
          %s139 = scalar_lea.vmem [#allocation4], %s138
          %s140 = smul.u32 16, %s25
          %s142 = ssub.s32 2048, 2048
          %143 = vsyncadd %s136, %s142
          %s144 = smul.addr %s140, 2
          %s145 = smul.addr %s144, 64
          %s146 = scalar_lea.hbm %s0, %s145
          %s147 = sshll.u32 %s139, 4
          %s148 = int_to_ptr.vmem [resolvable:$true] %s147
          %153 = dma.hbm_to_vmem [thread:$0]  %s146, 2048, %s148, %s136, 128, 128, 8
        $region20: #{tpu_custom_call.1} parent=15 // pred_fallthru
          _
        // Predicated region
        $region21: #{tpu_custom_call.1} parent=15 // pred_check
          %p154 = pneg %p79
        $region22: #{tpu_custom_call.1} parent=15 // pred_check_branch
          %156 = sbr.rel (%p154) target = $region24
        $region23: #{tpu_custom_call.1} parent=15 // pred_region
          %s157 = sand.u32 %s69, 1
          %s158 = scalar_lea.sflag [#allocation8], %s157
          %s159 = sand.u32 %s69, 1
          %s160 = smul.addr %s159, 64
          %s161 = scalar_lea.vmem [#allocation7], %s160
          %s162 = ssub.s32 1, %s24
          %s163 = smul.u32 %s25, %s162
          %s165 = ssub.s32 1024, 1024
          %166 = vsyncadd %s158, %s165
          %s167 = smul.addr %s163, 64
          %s168 = scalar_lea.hbm %s1, %s167
          %s169 = sshll.u32 %s161, 4
          %s170 = int_to_ptr.vmem [resolvable:$true] %s169
          %175 = dma.hbm_to_vmem [thread:$0]  %s168, 1024, %s170, %s158, 192, 64, 4
        $region24: #{tpu_custom_call.1} parent=15 // pred_fallthru
          _
      $region16: #{tpu_custom_call.1} parent=5 // pred_fallthru
        _
      %p176 = scmp.le.s32.totalorder 1, %s17
      %p177 = scmp.lt.s32.totalorder %s17, 7
      %p178 = pnand %p176, %p177
      %p179 = pneg %p178
      // Predicated region
      $region25: #{tpu_custom_call.1} parent=5 // pred_check
        _
      $region26: #{tpu_custom_call.1} parent=5 // pred_check_branch
        %181 = sbr.rel (%p178) target = $region28
      $region27: #{tpu_custom_call.1} parent=5 // pred_region
        %s182 = ssub.s32 %s17, 1
        %s183 = sand.u32 %s42, 1
        %s184 = scalar_lea.sflag [#allocation5], %s183
        %s185 = sand.u32 %s42, 1
        %s186 = smul.addr %s185, 128
        %s187 = scalar_lea.vmem [#allocation4], %s186
        // Predicated region
        $region29: #{tpu_custom_call.1} parent=27 // pred_check
          %p188 = pneg %p55
        $region30: #{tpu_custom_call.1} parent=27 // pred_check_branch
          %190 = sbr.rel (%p188) target = $region32
        $region31: #{tpu_custom_call.1} parent=27 // pred_region
          %191 = dma.done %s184, 2048
        $region32: #{tpu_custom_call.1} parent=27 // pred_fallthru
          _
        %s192 = sand.u32 %s72, 1
        %s193 = scalar_lea.sflag [#allocation8], %s192
        %s194 = sand.u32 %s72, 1
        %s195 = smul.addr %s194, 64
        %s196 = scalar_lea.vmem [#allocation7], %s195
        // Predicated region
        $region33: #{tpu_custom_call.1} parent=27 // pred_check
          %p197 = pneg %p85
        $region34: #{tpu_custom_call.1} parent=27 // pred_check_branch
          %199 = sbr.rel (%p197) target = $region36
        $region35: #{tpu_custom_call.1} parent=27 // pred_region
          %200 = dma.done %s193, 1024
        $region36: #{tpu_custom_call.1} parent=27 // pred_fallthru
          _
        %s201 = sand.u32 %s42, 1
        %s202 = scalar_lea.sflag [#allocation5], %s201
        %s203 = sand.u32 %s42, 1
        %s204 = smul.addr %s203, 128
        %s205 = scalar_lea.vmem [#allocation4], %s204
        %p206 = pneg %p55
        %p207 = pneg %p52
        %s208 = sand.u32 %s72, 1
        %s209 = scalar_lea.sflag [#allocation8], %s208
        %s210 = sand.u32 %s72, 1
        %s211 = smul.addr %s210, 64
        %s212 = scalar_lea.vmem [#allocation7], %s211
        %p213 = pneg %p85
        %p214 = pneg %p82
        %p215 = pneg %p113
        %p216 = pneg %p110
        %s217 = sand.u32 %s100, 1
        %s218 = scalar_lea.sflag [#allocation6], %s217
        %s219 = sand.u32 %s100, 1
        %s220 = smul.addr %s219, 128
        %s221 = scalar_lea.vmem [#allocation9], %s220
        %s222 = smul.u32 16, %s27
        %s223 = ssub.s32 1, %s26
        %s224 = smul.u32 %s27, %s223
        %s225 = smul.u32 %s27, %s26
        %s226 = smul.u32 16, %s225
        %p228 = scmp.eq.s32.totalorder %s26, 0
        %p229 = scmp.eq.s32.totalorder %s27, 0
        %p230 = pnand %p228, %p229
        %p231 = pneg %p230
        // Predicated region
        $region37: #{tpu_custom_call.1} parent=27 // pred_check
          _
        $region38: #{tpu_custom_call.1} parent=27 // pred_check_branch
          %233 = sbr.rel (%p230) target = $region40
        $region39: #{tpu_custom_call.1} parent=27 // pred_region
          %234 = vst [vmem:[#allocation2] sm:$0xff] 0.0
          %235 = vst [vmem:[#allocation2 + $0x8] sm:$0xff] 0.0
          %236 = vst [vmem:[#allocation2 + $0x10] sm:$0xff] 0.0
          %237 = vst [vmem:[#allocation2 + $0x18] sm:$0xff] 0.0
          %238 = vst [vmem:[#allocation2 + $0x20] sm:$0xff] 0.0
          %239 = vst [vmem:[#allocation2 + $0x28] sm:$0xff] 0.0
          %240 = vst [vmem:[#allocation2 + $0x30] sm:$0xff] 0.0
          %241 = vst [vmem:[#allocation2 + $0x38] sm:$0xff] 0.0
          %242 = vst [vmem:[#allocation2 + $0x40] sm:$0xff] 0.0
          %243 = vst [vmem:[#allocation2 + $0x48] sm:$0xff] 0.0
          %244 = vst [vmem:[#allocation2 + $0x50] sm:$0xff] 0.0
          %245 = vst [vmem:[#allocation2 + $0x58] sm:$0xff] 0.0
          %246 = vst [vmem:[#allocation2 + $0x60] sm:$0xff] 0.0
          %247 = vst [vmem:[#allocation2 + $0x68] sm:$0xff] 0.0
          %248 = vst [vmem:[#allocation2 + $0x70] sm:$0xff] 0.0
          %249 = vst [vmem:[#allocation2 + $0x78] sm:$0xff] 0.0
          %250 = vst [vmem:[#allocation2 + $0x80] sm:$0xff] 0.0
          %251 = vst [vmem:[#allocation2 + $0x88] sm:$0xff] 0.0
          %252 = vst [vmem:[#allocation2 + $0x90] sm:$0xff] 0.0
          %253 = vst [vmem:[#allocation2 + $0x98] sm:$0xff] 0.0
          %254 = vst [vmem:[#allocation2 + $0xa0] sm:$0xff] 0.0
          %255 = vst [vmem:[#allocation2 + $0xa8] sm:$0xff] 0.0
          %256 = vst [vmem:[#allocation2 + $0xb0] sm:$0xff] 0.0
          %257 = vst [vmem:[#allocation2 + $0xb8] sm:$0xff] 0.0
          %258 = vst [vmem:[#allocation2 + $0xc0] sm:$0xff] 0.0
          %259 = vst [vmem:[#allocation2 + $0xc8] sm:$0xff] 0.0
          %260 = vst [vmem:[#allocation2 + $0xd0] sm:$0xff] 0.0
          %261 = vst [vmem:[#allocation2 + $0xd8] sm:$0xff] 0.0
          %262 = vst [vmem:[#allocation2 + $0xe0] sm:$0xff] 0.0
          %263 = vst [vmem:[#allocation2 + $0xe8] sm:$0xff] 0.0
          %264 = vst [vmem:[#allocation2 + $0xf0] sm:$0xff] 0.0
          %265 = vst [vmem:[#allocation2 + $0xf8] sm:$0xff] 0.0
        $region40: #{tpu_custom_call.1} parent=27 // pred_fallthru
          _
        // Predicated region
        $region41: #{tpu_custom_call.1} parent=27 // pred_check
          %p266 = pneg %p228
        $region42: #{tpu_custom_call.1} parent=27 // pred_check_branch
          %268 = sbr.rel (%p266) target = $region44
        $region43: #{tpu_custom_call.1} parent=27 // pred_region
          %v269 = vld [vmem:[#allocation2] sm:$0xff]
          %v270 = vld [vmem:[#allocation2 + $0x8] sm:$0xff]
          %v271 = vld [vmem:[#allocation2 + $0x10] sm:$0xff]
          %v272 = vld [vmem:[#allocation2 + $0x18] sm:$0xff]
          %v273 = vld [vmem:[#allocation2 + $0x20] sm:$0xff]
          %v274 = vld [vmem:[#allocation2 + $0x28] sm:$0xff]
          %v275 = vld [vmem:[#allocation2 + $0x30] sm:$0xff]
          %v276 = vld [vmem:[#allocation2 + $0x38] sm:$0xff]
          %v277 = vld [vmem:[#allocation2 + $0x40] sm:$0xff]
          %v278 = vld [vmem:[#allocation2 + $0x48] sm:$0xff]
          %v279 = vld [vmem:[#allocation2 + $0x50] sm:$0xff]
          %v280 = vld [vmem:[#allocation2 + $0x58] sm:$0xff]
          %v281 = vld [vmem:[#allocation2 + $0x60] sm:$0xff]
          %v282 = vld [vmem:[#allocation2 + $0x68] sm:$0xff]
          %v283 = vld [vmem:[#allocation2 + $0x70] sm:$0xff]
          %v284 = vld [vmem:[#allocation2 + $0x78] sm:$0xff]
          %v285 = vld [vmem:[#allocation2 + $0x80] sm:$0xff]
          %v286 = vld [vmem:[#allocation2 + $0x88] sm:$0xff]
          %v287 = vld [vmem:[#allocation2 + $0x90] sm:$0xff]
          %v288 = vld [vmem:[#allocation2 + $0x98] sm:$0xff]
          %v289 = vld [vmem:[#allocation2 + $0xa0] sm:$0xff]
          %v290 = vld [vmem:[#allocation2 + $0xa8] sm:$0xff]
          %v291 = vld [vmem:[#allocation2 + $0xb0] sm:$0xff]
          %v292 = vld [vmem:[#allocation2 + $0xb8] sm:$0xff]
          %v293 = vld [vmem:[#allocation2 + $0xc0] sm:$0xff]
          %v294 = vld [vmem:[#allocation2 + $0xc8] sm:$0xff]
          %v295 = vld [vmem:[#allocation2 + $0xd0] sm:$0xff]
          %v296 = vld [vmem:[#allocation2 + $0xd8] sm:$0xff]
          %v297 = vld [vmem:[#allocation2 + $0xe0] sm:$0xff]
          %v298 = vld [vmem:[#allocation2 + $0xe8] sm:$0xff]
          %v299 = vld [vmem:[#allocation2 + $0xf0] sm:$0xff]
          %v300 = vld [vmem:[#allocation2 + $0xf8] sm:$0xff]
          %v301 = vld [vmem:[%s196] sm:$0xf]
          %v302 = vld [vmem:[%s196 + $0x4] sm:$0xf]
          %v303 = vld [vmem:[%s196 + $0x8] sm:$0xf]
          %v304 = vld [vmem:[%s196 + $0xc] sm:$0xf]
          %v305 = vld [vmem:[%s196 + $0x10] sm:$0xf]
          %v306 = vld [vmem:[%s196 + $0x14] sm:$0xf]
          %v307 = vld [vmem:[%s196 + $0x18] sm:$0xf]
          %v308 = vld [vmem:[%s196 + $0x1c] sm:$0xf]
          %v309 = vld [vmem:[%s196 + $0x20] sm:$0xf]
          %v310 = vld [vmem:[%s196 + $0x24] sm:$0xf]
          %v311 = vld [vmem:[%s196 + $0x28] sm:$0xf]
          %v312 = vld [vmem:[%s196 + $0x2c] sm:$0xf]
          %v313 = vld [vmem:[%s196 + $0x30] sm:$0xf]
          %v314 = vld [vmem:[%s196 + $0x34] sm:$0xf]
          %v315 = vld [vmem:[%s196 + $0x38] sm:$0xf]
          %v316 = vld [vmem:[%s196 + $0x3c] sm:$0xf]
          %v317 = vld [vmem:[%s187] sm:$0xff]
          %v318 = vld [vmem:[%s187 + $0x8] sm:$0xff]
          %v319 = vld [vmem:[%s187 + $0x10] sm:$0xff]
          %v320 = vld [vmem:[%s187 + $0x18] sm:$0xff]
          %v321 = vld [vmem:[%s187 + $0x20] sm:$0xff]
          %v322 = vld [vmem:[%s187 + $0x28] sm:$0xff]
          %v323 = vld [vmem:[%s187 + $0x30] sm:$0xff]
          %v324 = vld [vmem:[%s187 + $0x38] sm:$0xff]
          %v325 = vld [vmem:[%s187 + $0x40] sm:$0xff]
          %v326 = vld [vmem:[%s187 + $0x48] sm:$0xff]
          %v327 = vld [vmem:[%s187 + $0x50] sm:$0xff]
          %v328 = vld [vmem:[%s187 + $0x58] sm:$0xff]
          %v329 = vld [vmem:[%s187 + $0x60] sm:$0xff]
          %v330 = vld [vmem:[%s187 + $0x68] sm:$0xff]
          %v331 = vld [vmem:[%s187 + $0x70] sm:$0xff]
          %v332 = vld [vmem:[%s187 + $0x78] sm:$0xff]
          %v349 = vunpack.c.l.b16 %v301
          %v350 = vunpack.c.l.b16 %v302
          %v351 = vunpack.c.l.b16 %v303
          %v352 = vunpack.c.l.b16 %v304
          %v353 = vunpack.c.l.b16 %v305
          %v354 = vunpack.c.l.b16 %v306
          %v355 = vunpack.c.l.b16 %v307
          %v356 = vunpack.c.l.b16 %v308
          %v357 = vunpack.c.l.b16 %v309
          %v358 = vunpack.c.l.b16 %v310
          %v359 = vunpack.c.l.b16 %v311
          %v360 = vunpack.c.l.b16 %v312
          %v361 = vunpack.c.l.b16 %v313
          %v362 = vunpack.c.l.b16 %v314
          %v363 = vunpack.c.l.b16 %v315
          %v364 = vunpack.c.l.b16 %v316
          %v365 = vpack.c.b16 %v350, %v349
          %v366 = vpack.c.b16 %v352, %v351
          %v367 = vpack.c.b16 %v354, %v353
          %v368 = vpack.c.b16 %v356, %v355
          %v369 = vpack.c.b16 %v358, %v357
          %v370 = vpack.c.b16 %v360, %v359
          %v371 = vpack.c.b16 %v362, %v361
          %v372 = vpack.c.b16 %v364, %v363
          %v397 = vunpack.c.l.b16 %v317
          %v398 = vunpack.c.h.b16 %v317
          %v399 = vunpack.c.l.b16 %v318
          %v400 = vunpack.c.h.b16 %v318
          %v401 = vunpack.c.l.b16 %v319
          %v402 = vunpack.c.h.b16 %v319
          %v403 = vunpack.c.l.b16 %v320
          %v404 = vunpack.c.h.b16 %v320
          %v405 = vunpack.c.l.b16 %v321
          %v406 = vunpack.c.h.b16 %v321
          %v407 = vunpack.c.l.b16 %v322
          %v408 = vunpack.c.h.b16 %v322
          %v409 = vunpack.c.l.b16 %v323
          %v410 = vunpack.c.h.b16 %v323
          %v411 = vunpack.c.l.b16 %v324
          %v412 = vunpack.c.h.b16 %v324
          %v413 = vunpack.c.l.b16 %v325
          %v414 = vunpack.c.h.b16 %v325
          %v415 = vunpack.c.l.b16 %v326
          %v416 = vunpack.c.h.b16 %v326
          %v417 = vunpack.c.l.b16 %v327
          %v418 = vunpack.c.h.b16 %v327
          %v419 = vunpack.c.l.b16 %v328
          %v420 = vunpack.c.h.b16 %v328
          %v421 = vunpack.c.l.b16 %v329
          %v422 = vunpack.c.h.b16 %v329
          %v423 = vunpack.c.l.b16 %v330
          %v424 = vunpack.c.h.b16 %v330
          %v425 = vunpack.c.l.b16 %v331
          %v426 = vunpack.c.h.b16 %v331
          %v427 = vunpack.c.l.b16 %v332
          %v428 = vunpack.c.h.b16 %v332
          %v429 = vpack.c.b16 %v399, %v397
          %v430 = vpack.c.b16 %v400, %v398
          %v431 = vpack.c.b16 %v403, %v401
          %v432 = vpack.c.b16 %v404, %v402
          %v433 = vpack.c.b16 %v407, %v405
          %v434 = vpack.c.b16 %v408, %v406
          %v435 = vpack.c.b16 %v411, %v409
          %v436 = vpack.c.b16 %v412, %v410
          %v437 = vpack.c.b16 %v415, %v413
          %v438 = vpack.c.b16 %v416, %v414
          %v439 = vpack.c.b16 %v419, %v417
          %v440 = vpack.c.b16 %v420, %v418
          %v441 = vpack.c.b16 %v423, %v421
          %v442 = vpack.c.b16 %v424, %v422
          %v443 = vpack.c.b16 %v427, %v425
          %v444 = vpack.c.b16 %v428, %v426
          %461 = vmatprep.subr.bf16.mxu0 %v430
          %462 = vmatpush1.bf16.msra.mxu0 %v429
          %463 = vmatprep.subr.bf16.mxu0 %v432
          %464 = vmatpush1.bf16.msra.mxu0 %v431
          %465 = vmatprep.subr.bf16.mxu0 %v434
          %466 = vmatpush1.bf16.msra.mxu0 %v433
          %467 = vmatprep.subr.bf16.mxu0 %v436
          %468 = vmatpush1.bf16.msra.mxu0 %v435
          %469 = vmatprep.subr.bf16.mxu0 %v438
          %470 = vmatpush1.bf16.msra.mxu0 %v437
          %471 = vmatprep.subr.bf16.mxu0 %v440
          %472 = vmatpush1.bf16.msra.mxu0 %v439
          %473 = vmatprep.subr.bf16.mxu0 %v442
          %474 = vmatpush1.bf16.msra.mxu0 %v441
          %475 = vmatprep.subr.bf16.mxu0 %v444
          %476 = vmatpush1.bf16.msra.mxu0 %v443
          %477 = vmatprep.subr.bf16.mxu0 0
          %478 = vmatpush1.bf16.msra.mxu0 0
          %479 = vmatprep.subr.bf16.mxu0 0
          %480 = vmatpush1.bf16.msra.mxu0 0
          %481 = vmatprep.subr.bf16.mxu0 0
          %482 = vmatpush1.bf16.msra.mxu0 0
          %483 = vmatprep.subr.bf16.mxu0 0
          %484 = vmatpush1.bf16.msra.mxu0 0
          %485 = vmatprep.subr.bf16.mxu0 0
          %486 = vmatpush1.bf16.msra.mxu0 0
          %487 = vmatprep.subr.bf16.mxu0 0
          %488 = vmatpush1.bf16.msra.mxu0 0
          %489 = vmatprep.subr.bf16.mxu0 0
          %490 = vmatpush1.bf16.msra.mxu0 0
          %491 = vmatprep.subr.bf16.mxu0 0
          %492 = vmatpush1.bf16.msra.mxu0 0
          %493 = vmatprep.mubr.bf16.mxu0 0
          %494 = vmatmul.mubr.bf16.gmra.mrb[0].mxu0 %v365
          %v495 = vpop.f32.mrb[0].mxu0
          %v496 = vadd.f32 0.0, %v495
          %v497 = vpop.f32.mrb[0].mxu0
          %v498 = vadd.f32 0.0, %v497
          %v499 = vpop.f32.mrb[0].mxu0
          %v500 = vadd.f32 0.0, %v499
          %v501 = vpop.f32.mrb[0].mxu0
          %v502 = vadd.f32 0.0, %v501
          %503 = vmatprep.mubr.bf16.mxu0 0
          %504 = vmatmul.mubr.bf16.gmra.mrb[0].mxu0 %v366
          %v505 = vpop.f32.mrb[0].mxu0
          %v506 = vadd.f32 0.0, %v505
          %v507 = vpop.f32.mrb[0].mxu0
          %v508 = vadd.f32 0.0, %v507
          %v509 = vpop.f32.mrb[0].mxu0
          %v510 = vadd.f32 0.0, %v509
          %v511 = vpop.f32.mrb[0].mxu0
          %v512 = vadd.f32 0.0, %v511
          %513 = vmatprep.mubr.bf16.mxu0 0
          %514 = vmatmul.mubr.bf16.gmra.mrb[0].mxu0 %v367
          %v515 = vpop.f32.mrb[0].mxu0
          %v516 = vadd.f32 0.0, %v515
          %v517 = vpop.f32.mrb[0].mxu0
          %v518 = vadd.f32 0.0, %v517
          %v519 = vpop.f32.mrb[0].mxu0
          %v520 = vadd.f32 0.0, %v519
          %v521 = vpop.f32.mrb[0].mxu0
          %v522 = vadd.f32 0.0, %v521
          %523 = vmatprep.mubr.bf16.mxu0 0
          %524 = vmatmul.mubr.bf16.gmra.mrb[0].mxu0 %v368
          %v525 = vpop.f32.mrb[0].mxu0
          %v526 = vadd.f32 0.0, %v525
          %v527 = vpop.f32.mrb[0].mxu0
          %v528 = vadd.f32 0.0, %v527
          %v529 = vpop.f32.mrb[0].mxu0
          %v530 = vadd.f32 0.0, %v529
          %v531 = vpop.f32.mrb[0].mxu0
          %v532 = vadd.f32 0.0, %v531
          %533 = vmatprep.mubr.bf16.mxu0 0
          %534 = vmatmul.mubr.bf16.gmra.mrb[0].mxu0 %v369
          %v535 = vpop.f32.mrb[0].mxu0
          %v536 = vadd.f32 0.0, %v535
          %v537 = vpop.f32.mrb[0].mxu0
          %v538 = vadd.f32 0.0, %v537
          %v539 = vpop.f32.mrb[0].mxu0
          %v540 = vadd.f32 0.0, %v539
          %v541 = vpop.f32.mrb[0].mxu0
          %v542 = vadd.f32 0.0, %v541
          %543 = vmatprep.mubr.bf16.mxu0 0
          %544 = vmatmul.mubr.bf16.gmra.mrb[0].mxu0 %v370
          %v545 = vpop.f32.mrb[0].mxu0
          %v546 = vadd.f32 0.0, %v545
          %v547 = vpop.f32.mrb[0].mxu0
          %v548 = vadd.f32 0.0, %v547
          %v549 = vpop.f32.mrb[0].mxu0
          %v550 = vadd.f32 0.0, %v549
          %v551 = vpop.f32.mrb[0].mxu0
          %v552 = vadd.f32 0.0, %v551
          %553 = vmatprep.mubr.bf16.mxu0 0
          %554 = vmatmul.mubr.bf16.gmra.mrb[0].mxu0 %v371
          %v555 = vpop.f32.mrb[0].mxu0
          %v556 = vadd.f32 0.0, %v555
          %v557 = vpop.f32.mrb[0].mxu0
          %v558 = vadd.f32 0.0, %v557
          %v559 = vpop.f32.mrb[0].mxu0
          %v560 = vadd.f32 0.0, %v559
          %v561 = vpop.f32.mrb[0].mxu0
          %v562 = vadd.f32 0.0, %v561
          %563 = vmatprep.mubr.bf16.mxu0 0
          %564 = vmatmul.mubr.bf16.gmra.mrb[0].mxu0 %v372
          %v565 = vpop.f32.mrb[0].mxu0
          %v566 = vadd.f32 0.0, %v565
          %v567 = vpop.f32.mrb[0].mxu0
          %v568 = vadd.f32 0.0, %v567
          %v569 = vpop.f32.mrb[0].mxu0
          %v570 = vadd.f32 0.0, %v569
          %v571 = vpop.f32.mrb[0].mxu0
          %v572 = vadd.f32 0.0, %v571
          %573 = vdwg.mxu0
          %v574 = vadd.f32 %v269, %v496
          %v575 = vadd.f32 %v270, %v498
          %v576 = vadd.f32 %v271, %v500
          %v577 = vadd.f32 %v272, %v502
          %v578 = vadd.f32 %v273, %v506
          %v579 = vadd.f32 %v274, %v508
          %v580 = vadd.f32 %v275, %v510
          %v581 = vadd.f32 %v276, %v512
          %v582 = vadd.f32 %v277, %v516
          %v583 = vadd.f32 %v278, %v518
          %v584 = vadd.f32 %v279, %v520
          %v585 = vadd.f32 %v280, %v522
          %v586 = vadd.f32 %v281, %v526
          %v587 = vadd.f32 %v282, %v528
          %v588 = vadd.f32 %v283, %v530
          %v589 = vadd.f32 %v284, %v532
          %v590 = vadd.f32 %v285, %v536
          %v591 = vadd.f32 %v286, %v538
          %v592 = vadd.f32 %v287, %v540
          %v593 = vadd.f32 %v288, %v542
          %v594 = vadd.f32 %v289, %v546
          %v595 = vadd.f32 %v290, %v548
          %v596 = vadd.f32 %v291, %v550
          %v597 = vadd.f32 %v292, %v552
          %v598 = vadd.f32 %v293, %v556
          %v599 = vadd.f32 %v294, %v558
          %v600 = vadd.f32 %v295, %v560
          %v601 = vadd.f32 %v296, %v562
          %v602 = vadd.f32 %v297, %v566
          %v603 = vadd.f32 %v298, %v568
          %v604 = vadd.f32 %v299, %v570
          %v605 = vadd.f32 %v300, %v572
          %606 = vst [vmem:[#allocation2] sm:$0xff] %v574
          %607 = vst [vmem:[#allocation2 + $0x8] sm:$0xff] %v575
          %608 = vst [vmem:[#allocation2 + $0x10] sm:$0xff] %v576
          %609 = vst [vmem:[#allocation2 + $0x18] sm:$0xff] %v577
          %610 = vst [vmem:[#allocation2 + $0x20] sm:$0xff] %v578
          %611 = vst [vmem:[#allocation2 + $0x28] sm:$0xff] %v579
          %612 = vst [vmem:[#allocation2 + $0x30] sm:$0xff] %v580
          %613 = vst [vmem:[#allocation2 + $0x38] sm:$0xff] %v581
          %614 = vst [vmem:[#allocation2 + $0x40] sm:$0xff] %v582
          %615 = vst [vmem:[#allocation2 + $0x48] sm:$0xff] %v583
          %616 = vst [vmem:[#allocation2 + $0x50] sm:$0xff] %v584
          %617 = vst [vmem:[#allocation2 + $0x58] sm:$0xff] %v585
          %618 = vst [vmem:[#allocation2 + $0x60] sm:$0xff] %v586
          %619 = vst [vmem:[#allocation2 + $0x68] sm:$0xff] %v587
          %620 = vst [vmem:[#allocation2 + $0x70] sm:$0xff] %v588
          %621 = vst [vmem:[#allocation2 + $0x78] sm:$0xff] %v589
          %622 = vst [vmem:[#allocation2 + $0x80] sm:$0xff] %v590
          %623 = vst [vmem:[#allocation2 + $0x88] sm:$0xff] %v591
          %624 = vst [vmem:[#allocation2 + $0x90] sm:$0xff] %v592
          %625 = vst [vmem:[#allocation2 + $0x98] sm:$0xff] %v593
          %626 = vst [vmem:[#allocation2 + $0xa0] sm:$0xff] %v594
          %627 = vst [vmem:[#allocation2 + $0xa8] sm:$0xff] %v595
          %628 = vst [vmem:[#allocation2 + $0xb0] sm:$0xff] %v596
          %629 = vst [vmem:[#allocation2 + $0xb8] sm:$0xff] %v597
          %630 = vst [vmem:[#allocation2 + $0xc0] sm:$0xff] %v598
          %631 = vst [vmem:[#allocation2 + $0xc8] sm:$0xff] %v599
          %632 = vst [vmem:[#allocation2 + $0xd0] sm:$0xff] %v600
          %633 = vst [vmem:[#allocation2 + $0xd8] sm:$0xff] %v601
          %634 = vst [vmem:[#allocation2 + $0xe0] sm:$0xff] %v602
          %635 = vst [vmem:[#allocation2 + $0xe8] sm:$0xff] %v603
          %636 = vst [vmem:[#allocation2 + $0xf0] sm:$0xff] %v604
          %637 = vst [vmem:[#allocation2 + $0xf8] sm:$0xff] %v605
        $region44: #{tpu_custom_call.1} parent=27 // pred_fallthru
          _
        %p638 = scmp.eq.s32.totalorder %s26, 1
        %p639 = pnand %p638, %p229
        %p640 = pneg %p639
        // Predicated region
        $region45: #{tpu_custom_call.1} parent=27 // pred_check
          _
        $region46: #{tpu_custom_call.1} parent=27 // pred_check_branch
          %642 = sbr.rel (%p639) target = $region48
        $region47: #{tpu_custom_call.1} parent=27 // pred_region
          %v643 = vld [vmem:[#allocation2] sm:$0xff]
          %v644 = vld [vmem:[#allocation2 + $0x8] sm:$0xff]
          %v645 = vld [vmem:[#allocation2 + $0x10] sm:$0xff]
          %v646 = vld [vmem:[#allocation2 + $0x18] sm:$0xff]
          %v647 = vld [vmem:[#allocation2 + $0x20] sm:$0xff]
          %v648 = vld [vmem:[#allocation2 + $0x28] sm:$0xff]
          %v649 = vld [vmem:[#allocation2 + $0x30] sm:$0xff]
          %v650 = vld [vmem:[#allocation2 + $0x38] sm:$0xff]
          %v651 = vld [vmem:[#allocation2 + $0x40] sm:$0xff]
          %v652 = vld [vmem:[#allocation2 + $0x48] sm:$0xff]
          %v653 = vld [vmem:[#allocation2 + $0x50] sm:$0xff]
          %v654 = vld [vmem:[#allocation2 + $0x58] sm:$0xff]
          %v655 = vld [vmem:[#allocation2 + $0x60] sm:$0xff]
          %v656 = vld [vmem:[#allocation2 + $0x68] sm:$0xff]
          %v657 = vld [vmem:[#allocation2 + $0x70] sm:$0xff]
          %v658 = vld [vmem:[#allocation2 + $0x78] sm:$0xff]
          %v659 = vld [vmem:[#allocation2 + $0x80] sm:$0xff]
          %v660 = vld [vmem:[#allocation2 + $0x88] sm:$0xff]
          %v661 = vld [vmem:[#allocation2 + $0x90] sm:$0xff]
          %v662 = vld [vmem:[#allocation2 + $0x98] sm:$0xff]
          %v663 = vld [vmem:[#allocation2 + $0xa0] sm:$0xff]
          %v664 = vld [vmem:[#allocation2 + $0xa8] sm:$0xff]
          %v665 = vld [vmem:[#allocation2 + $0xb0] sm:$0xff]
          %v666 = vld [vmem:[#allocation2 + $0xb8] sm:$0xff]
          %v667 = vld [vmem:[#allocation2 + $0xc0] sm:$0xff]
          %v668 = vld [vmem:[#allocation2 + $0xc8] sm:$0xff]
          %v669 = vld [vmem:[#allocation2 + $0xd0] sm:$0xff]
          %v670 = vld [vmem:[#allocation2 + $0xd8] sm:$0xff]
          %v671 = vld [vmem:[#allocation2 + $0xe0] sm:$0xff]
          %v672 = vld [vmem:[#allocation2 + $0xe8] sm:$0xff]
          %v673 = vld [vmem:[#allocation2 + $0xf0] sm:$0xff]
          %v674 = vld [vmem:[#allocation2 + $0xf8] sm:$0xff]
          %v675 = vpack.c.bf16 %v645, %v643
          %v676 = vpack.c.bf16 %v646, %v644
          %v677 = vpack.c.bf16 %v649, %v647
          %v678 = vpack.c.bf16 %v650, %v648
          %v679 = vpack.c.bf16 %v653, %v651
          %v680 = vpack.c.bf16 %v654, %v652
          %v681 = vpack.c.bf16 %v657, %v655
          %v682 = vpack.c.bf16 %v658, %v656
          %v683 = vpack.c.bf16 %v661, %v659
          %v684 = vpack.c.bf16 %v662, %v660
          %v685 = vpack.c.bf16 %v665, %v663
          %v686 = vpack.c.bf16 %v666, %v664
          %v687 = vpack.c.bf16 %v669, %v667
          %v688 = vpack.c.bf16 %v670, %v668
          %v689 = vpack.c.bf16 %v673, %v671
          %v690 = vpack.c.bf16 %v674, %v672
          %691 = vst [vmem:[#allocation3] sm:$0xff] %v675
          %692 = vst [vmem:[#allocation3 + $0x8] sm:$0xff] %v676
          %693 = vst [vmem:[#allocation3 + $0x10] sm:$0xff] %v677
          %694 = vst [vmem:[#allocation3 + $0x18] sm:$0xff] %v678
          %695 = vst [vmem:[#allocation3 + $0x20] sm:$0xff] %v679
          %696 = vst [vmem:[#allocation3 + $0x28] sm:$0xff] %v680
          %697 = vst [vmem:[#allocation3 + $0x30] sm:$0xff] %v681
          %698 = vst [vmem:[#allocation3 + $0x38] sm:$0xff] %v682
          %699 = vst [vmem:[#allocation3 + $0x40] sm:$0xff] %v683
          %700 = vst [vmem:[#allocation3 + $0x48] sm:$0xff] %v684
          %701 = vst [vmem:[#allocation3 + $0x50] sm:$0xff] %v685
          %702 = vst [vmem:[#allocation3 + $0x58] sm:$0xff] %v686
          %703 = vst [vmem:[#allocation3 + $0x60] sm:$0xff] %v687
          %704 = vst [vmem:[#allocation3 + $0x68] sm:$0xff] %v688
          %705 = vst [vmem:[#allocation3 + $0x70] sm:$0xff] %v689
          %706 = vst [vmem:[#allocation3 + $0x78] sm:$0xff] %v690
        $region48: #{tpu_custom_call.1} parent=27 // pred_fallthru
          _
        // Predicated region
        $region49: #{tpu_custom_call.1} parent=27 // pred_check
          %p707 = pneg %p638
        $region50: #{tpu_custom_call.1} parent=27 // pred_check_branch
          %709 = sbr.rel (%p707) target = $region52
        $region51: #{tpu_custom_call.1} parent=27 // pred_region
          %v710 = vld [vmem:[%s187] sm:$0xff]
          %v711 = vld [vmem:[%s187 + $0x8] sm:$0xff]
          %v712 = vld [vmem:[%s187 + $0x10] sm:$0xff]
          %v713 = vld [vmem:[%s187 + $0x18] sm:$0xff]
          %v714 = vld [vmem:[%s187 + $0x20] sm:$0xff]
          %v715 = vld [vmem:[%s187 + $0x28] sm:$0xff]
          %v716 = vld [vmem:[%s187 + $0x30] sm:$0xff]
          %v717 = vld [vmem:[%s187 + $0x38] sm:$0xff]
          %v718 = vld [vmem:[%s187 + $0x40] sm:$0xff]
          %v719 = vld [vmem:[%s187 + $0x48] sm:$0xff]
          %v720 = vld [vmem:[%s187 + $0x50] sm:$0xff]
          %v721 = vld [vmem:[%s187 + $0x58] sm:$0xff]
          %v722 = vld [vmem:[%s187 + $0x60] sm:$0xff]
          %v723 = vld [vmem:[%s187 + $0x68] sm:$0xff]
          %v724 = vld [vmem:[%s187 + $0x70] sm:$0xff]
          %v725 = vld [vmem:[%s187 + $0x78] sm:$0xff]
          %v726 = vld [vmem:[#allocation3] sm:$0xff]
          %v727 = vld [vmem:[#allocation3 + $0x8] sm:$0xff]
          %v728 = vld [vmem:[#allocation3 + $0x10] sm:$0xff]
          %v729 = vld [vmem:[#allocation3 + $0x18] sm:$0xff]
          %v730 = vld [vmem:[#allocation3 + $0x20] sm:$0xff]
          %v731 = vld [vmem:[#allocation3 + $0x28] sm:$0xff]
          %v732 = vld [vmem:[#allocation3 + $0x30] sm:$0xff]
          %v733 = vld [vmem:[#allocation3 + $0x38] sm:$0xff]
          %v734 = vld [vmem:[#allocation3 + $0x40] sm:$0xff]
          %v735 = vld [vmem:[#allocation3 + $0x48] sm:$0xff]
          %v736 = vld [vmem:[#allocation3 + $0x50] sm:$0xff]
          %v737 = vld [vmem:[#allocation3 + $0x58] sm:$0xff]
          %v738 = vld [vmem:[#allocation3 + $0x60] sm:$0xff]
          %v739 = vld [vmem:[#allocation3 + $0x68] sm:$0xff]
          %v740 = vld [vmem:[#allocation3 + $0x70] sm:$0xff]
          %v741 = vld [vmem:[#allocation3 + $0x78] sm:$0xff]
          %v758 = vunpack.c.l.b16 %v710
          %v759 = vunpack.c.h.b16 %v710
          %v760 = vunpack.c.l.b16 %v711
          %v761 = vunpack.c.h.b16 %v711
          %v762 = vunpack.c.l.b16 %v712
          %v763 = vunpack.c.h.b16 %v712
          %v764 = vunpack.c.l.b16 %v713
          %v765 = vunpack.c.h.b16 %v713
          %v766 = vunpack.c.l.b16 %v714
          %v767 = vunpack.c.h.b16 %v714
          %v768 = vunpack.c.l.b16 %v715
          %v769 = vunpack.c.h.b16 %v715
          %v770 = vunpack.c.l.b16 %v716
          %v771 = vunpack.c.h.b16 %v716
          %v772 = vunpack.c.l.b16 %v717
          %v773 = vunpack.c.h.b16 %v717
          %v774 = vunpack.c.l.b16 %v718
          %v775 = vunpack.c.h.b16 %v718
          %v776 = vunpack.c.l.b16 %v719
          %v777 = vunpack.c.h.b16 %v719
          %v778 = vunpack.c.l.b16 %v720
          %v779 = vunpack.c.h.b16 %v720
          %v780 = vunpack.c.l.b16 %v721
          %v781 = vunpack.c.h.b16 %v721
          %v782 = vunpack.c.l.b16 %v722
          %v783 = vunpack.c.h.b16 %v722
          %v784 = vunpack.c.l.b16 %v723
          %v785 = vunpack.c.h.b16 %v723
          %v786 = vunpack.c.l.b16 %v724
          %v787 = vunpack.c.h.b16 %v724
          %v788 = vunpack.c.l.b16 %v725
          %v789 = vunpack.c.h.b16 %v725
          %v790 = vpack.c.b16 %v760, %v758
          %v791 = vpack.c.b16 %v761, %v759
          %v792 = vpack.c.b16 %v764, %v762
          %v793 = vpack.c.b16 %v765, %v763
          %v794 = vpack.c.b16 %v768, %v766
          %v795 = vpack.c.b16 %v769, %v767
          %v796 = vpack.c.b16 %v772, %v770
          %v797 = vpack.c.b16 %v773, %v771
          %v798 = vpack.c.b16 %v776, %v774
          %v799 = vpack.c.b16 %v777, %v775
          %v800 = vpack.c.b16 %v780, %v778
          %v801 = vpack.c.b16 %v781, %v779
          %v802 = vpack.c.b16 %v784, %v782
          %v803 = vpack.c.b16 %v785, %v783
          %v804 = vpack.c.b16 %v788, %v786
          %v805 = vpack.c.b16 %v789, %v787
          %822 = vmatprep.subr.bf16.mxu0 %v727
          %823 = vmatpush1.bf16.xpose.msra.mxu0 %v726
          %824 = vmatprep.subr.bf16.mxu0 %v729
          %825 = vmatpush1.bf16.xpose.msra.mxu0 %v728
          %826 = vmatprep.subr.bf16.mxu0 %v731
          %827 = vmatpush1.bf16.xpose.msra.mxu0 %v730
          %828 = vmatprep.subr.bf16.mxu0 %v733
          %829 = vmatpush1.bf16.xpose.msra.mxu0 %v732
          %830 = vmatprep.subr.bf16.mxu0 %v735
          %831 = vmatpush1.bf16.xpose.msra.mxu0 %v734
          %832 = vmatprep.subr.bf16.mxu0 %v737
          %833 = vmatpush1.bf16.xpose.msra.mxu0 %v736
          %834 = vmatprep.subr.bf16.mxu0 %v739
          %835 = vmatpush1.bf16.xpose.msra.mxu0 %v738
          %836 = vmatprep.subr.bf16.mxu0 %v741
          %837 = vmatpush1.bf16.xpose.msra.mxu0 %v740
          %838 = vmatprep.subr.bf16.mxu0 0
          %839 = vmatpush1.bf16.xpose.msra.mxu0 0
          %840 = vmatprep.subr.bf16.mxu0 0
          %841 = vmatpush1.bf16.xpose.msra.mxu0 0
          %842 = vmatprep.subr.bf16.mxu0 0
          %843 = vmatpush1.bf16.xpose.msra.mxu0 0
          %844 = vmatprep.subr.bf16.mxu0 0
          %845 = vmatpush1.bf16.xpose.msra.mxu0 0
          %846 = vmatprep.subr.bf16.mxu0 0
          %847 = vmatpush1.bf16.xpose.msra.mxu0 0
          %848 = vmatprep.subr.bf16.mxu0 0
          %849 = vmatpush1.bf16.xpose.msra.mxu0 0
          %850 = vmatprep.subr.bf16.mxu0 0
          %851 = vmatpush1.bf16.xpose.msra.mxu0 0
          %852 = vmatprep.subr.bf16.mxu0 0
          %853 = vmatpush1.bf16.xpose.msra.mxu0 0
          %854 = vmatprep.mubr.bf16.mxu0 %v791
          %855 = vmatmul.mubr.bf16.gmra.mrb[0].mxu0 %v790
          %v856 = vpop.f32.mrb[0].mxu0
          %v857 = vadd.f32 0.0, %v856
          %v858 = vpop.f32.mrb[0].mxu0
          %v859 = vpop.f32.mrb[0].mxu0
          %v860 = vadd.f32 0.0, %v859
          %v861 = vpop.f32.mrb[0].mxu0
          %862 = vmatprep.mubr.bf16.mxu0 %v793
          %863 = vmatmul.mubr.bf16.gmra.mrb[0].mxu0 %v792
          %v864 = vpop.f32.mrb[0].mxu0
          %v865 = vadd.f32 0.0, %v864
          %v866 = vpop.f32.mrb[0].mxu0
          %v867 = vpop.f32.mrb[0].mxu0
          %v868 = vadd.f32 0.0, %v867
          %v869 = vpop.f32.mrb[0].mxu0
          %870 = vmatprep.mubr.bf16.mxu0 %v795
          %871 = vmatmul.mubr.bf16.gmra.mrb[0].mxu0 %v794
          %v872 = vpop.f32.mrb[0].mxu0
          %v873 = vadd.f32 0.0, %v872
          %v874 = vpop.f32.mrb[0].mxu0
          %v875 = vpop.f32.mrb[0].mxu0
          %v876 = vadd.f32 0.0, %v875
          %v877 = vpop.f32.mrb[0].mxu0
          %878 = vmatprep.mubr.bf16.mxu0 %v797
          %879 = vmatmul.mubr.bf16.gmra.mrb[0].mxu0 %v796
          %v880 = vpop.f32.mrb[0].mxu0
          %v881 = vadd.f32 0.0, %v880
          %v882 = vpop.f32.mrb[0].mxu0
          %v883 = vpop.f32.mrb[0].mxu0
          %v884 = vadd.f32 0.0, %v883
          %v885 = vpop.f32.mrb[0].mxu0
          %886 = vmatprep.mubr.bf16.mxu0 %v799
          %887 = vmatmul.mubr.bf16.gmra.mrb[0].mxu0 %v798
          %v888 = vpop.f32.mrb[0].mxu0
          %v889 = vadd.f32 0.0, %v888
          %v890 = vpop.f32.mrb[0].mxu0
          %v891 = vpop.f32.mrb[0].mxu0
          %v892 = vadd.f32 0.0, %v891
          %v893 = vpop.f32.mrb[0].mxu0
          %894 = vmatprep.mubr.bf16.mxu0 %v801
          %895 = vmatmul.mubr.bf16.gmra.mrb[0].mxu0 %v800
          %v896 = vpop.f32.mrb[0].mxu0
          %v897 = vadd.f32 0.0, %v896
          %v898 = vpop.f32.mrb[0].mxu0
          %v899 = vpop.f32.mrb[0].mxu0
          %v900 = vadd.f32 0.0, %v899
          %v901 = vpop.f32.mrb[0].mxu0
          %902 = vmatprep.mubr.bf16.mxu0 %v803
          %903 = vmatmul.mubr.bf16.gmra.mrb[0].mxu0 %v802
          %v904 = vpop.f32.mrb[0].mxu0
          %v905 = vadd.f32 0.0, %v904
          %v906 = vpop.f32.mrb[0].mxu0
          %v907 = vpop.f32.mrb[0].mxu0
          %v908 = vadd.f32 0.0, %v907
          %v909 = vpop.f32.mrb[0].mxu0
          %910 = vmatprep.mubr.bf16.mxu0 %v805
          %911 = vmatmul.mubr.bf16.gmra.mrb[0].mxu0 %v804
          %v912 = vpop.f32.mrb[0].mxu0
          %v913 = vadd.f32 0.0, %v912
          %v914 = vpop.f32.mrb[0].mxu0
          %v915 = vpop.f32.mrb[0].mxu0
          %v916 = vadd.f32 0.0, %v915
          %v917 = vpop.f32.mrb[0].mxu0
          %918 = vdwg.mxu0
          %vm919 = vcmp.ge.f32.partialorder %v857, 0.0
          %vm920 = vcmp.ge.f32.partialorder %v860, 0.0
          %vm921 = vcmp.ge.f32.partialorder %v865, 0.0
          %vm922 = vcmp.ge.f32.partialorder %v868, 0.0
          %vm923 = vcmp.ge.f32.partialorder %v873, 0.0
          %vm924 = vcmp.ge.f32.partialorder %v876, 0.0
          %vm925 = vcmp.ge.f32.partialorder %v881, 0.0
          %vm926 = vcmp.ge.f32.partialorder %v884, 0.0
          %vm927 = vcmp.ge.f32.partialorder %v889, 0.0
          %vm928 = vcmp.ge.f32.partialorder %v892, 0.0
          %vm929 = vcmp.ge.f32.partialorder %v897, 0.0
          %vm930 = vcmp.ge.f32.partialorder %v900, 0.0
          %vm931 = vcmp.ge.f32.partialorder %v905, 0.0
          %vm932 = vcmp.ge.f32.partialorder %v908, 0.0
          %vm933 = vcmp.ge.f32.partialorder %v913, 0.0
          %vm934 = vcmp.ge.f32.partialorder %v916, 0.0
          %v935 = vmul.f32 %v857, 0.2
          %v936 = vmul.f32 %v860, 0.2
          %v937 = vmul.f32 %v865, 0.2
          %v938 = vmul.f32 %v868, 0.2
          %v939 = vmul.f32 %v873, 0.2
          %v940 = vmul.f32 %v876, 0.2
          %v941 = vmul.f32 %v881, 0.2
          %v942 = vmul.f32 %v884, 0.2
          %v943 = vmul.f32 %v889, 0.2
          %v944 = vmul.f32 %v892, 0.2
          %v945 = vmul.f32 %v897, 0.2
          %v946 = vmul.f32 %v900, 0.2
          %v947 = vmul.f32 %v905, 0.2
          %v948 = vmul.f32 %v908, 0.2
          %v949 = vmul.f32 %v913, 0.2
          %v950 = vmul.f32 %v916, 0.2
          %v951 = vsel %vm919, %v857, %v935
          %v952 = vsel %vm920, %v860, %v936
          %v953 = vsel %vm921, %v865, %v937
          %v954 = vsel %vm922, %v868, %v938
          %v955 = vsel %vm923, %v873, %v939
          %v956 = vsel %vm924, %v876, %v940
          %v957 = vsel %vm925, %v881, %v941
          %v958 = vsel %vm926, %v884, %v942
          %v959 = vsel %vm927, %v889, %v943
          %v960 = vsel %vm928, %v892, %v944
          %v961 = vsel %vm929, %v897, %v945
          %v962 = vsel %vm930, %v900, %v946
          %v963 = vsel %vm931, %v905, %v947
          %v964 = vsel %vm932, %v908, %v948
          %v965 = vsel %vm933, %v913, %v949
          %v966 = vsel %vm934, %v916, %v950
          %967 = vst [vmem:[%s221] sm:$0xff] %v951
          %968 = vst [vmem:[%s221 + $0x8] sm:$0xff] %v952
          %969 = vst [vmem:[%s221 + $0x10] sm:$0xff] %v953
          %970 = vst [vmem:[%s221 + $0x18] sm:$0xff] %v954
          %971 = vst [vmem:[%s221 + $0x20] sm:$0xff] %v955
          %972 = vst [vmem:[%s221 + $0x28] sm:$0xff] %v956
          %973 = vst [vmem:[%s221 + $0x30] sm:$0xff] %v957
          %974 = vst [vmem:[%s221 + $0x38] sm:$0xff] %v958
          %975 = vst [vmem:[%s221 + $0x40] sm:$0xff] %v959
          %976 = vst [vmem:[%s221 + $0x48] sm:$0xff] %v960
          %977 = vst [vmem:[%s221 + $0x50] sm:$0xff] %v961
          %978 = vst [vmem:[%s221 + $0x58] sm:$0xff] %v962
          %979 = vst [vmem:[%s221 + $0x60] sm:$0xff] %v963
          %980 = vst [vmem:[%s221 + $0x68] sm:$0xff] %v964
          %981 = vst [vmem:[%s221 + $0x70] sm:$0xff] %v965
          %982 = vst [vmem:[%s221 + $0x78] sm:$0xff] %v966
        $region52: #{tpu_custom_call.1} parent=27 // pred_fallthru
          _
        %s983 = sand.u32 %s100, 1
        %s984 = scalar_lea.sflag [#allocation6], %s983
        %s985 = sand.u32 %s100, 1
        %s986 = smul.addr %s985, 128
        %s987 = scalar_lea.vmem [#allocation9], %s986
        // Predicated region
        $region53: #{tpu_custom_call.1} parent=27 // pred_check
          %p988 = pneg %p110
        $region54: #{tpu_custom_call.1} parent=27 // pred_check_branch
          %990 = sbr.rel (%p988) target = $region56
        $region55: #{tpu_custom_call.1} parent=27 // pred_region
          %s991 = smul.u32 %s27, %s26
          %s992 = smul.u32 16, %s991
          %s994 = ssub.s32 2048, 2048
          %995 = vsyncadd %s984, %s994
          %s996 = smul.addr %s992, 128
          %s997 = scalar_lea.hbm %s2, %s996
          %s998 = sshll.u32 %s987, 4
          %s999 = int_to_ptr.vmem [resolvable:$true] %s998
          %1004 = dma.vmem_to_hbm [thread:$0]  %s999, 2048, %s997, %s984, 128, 128, 8
        $region56: #{tpu_custom_call.1} parent=27 // pred_fallthru
          _
      $region28: #{tpu_custom_call.1} parent=5 // pred_fallthru
        _
      %p1005 = scmp.le.s32.totalorder 2, %s17
      // Predicated region
      $region57: #{tpu_custom_call.1} parent=5 // pred_check
        %p1006 = pneg %p1005
      $region58: #{tpu_custom_call.1} parent=5 // pred_check_branch
        %1008 = sbr.rel (%p1006) target = $region60
      $region59: #{tpu_custom_call.1} parent=5 // pred_region
        %s1009 = ssub.s32 %s17, 2
        // Predicated region
        $region61: #{tpu_custom_call.1} parent=59 // pred_check
          %p1010 = pneg %p116
        $region62: #{tpu_custom_call.1} parent=59 // pred_check_branch
          %1012 = sbr.rel (%p1010) target = $region64
        $region63: #{tpu_custom_call.1} parent=59 // pred_region
          %s1013 = sand.u32 %s101, 1
          %s1014 = scalar_lea.sflag [#allocation6], %s1013
          %s1015 = sand.u32 %s101, 1
          %s1016 = smul.addr %s1015, 128
          %s1017 = scalar_lea.vmem [#allocation9], %s1016
          %1018 = dma.done %s1014, 2048
        $region64: #{tpu_custom_call.1} parent=59 // pred_fallthru
          _
      $region60: #{tpu_custom_call.1} parent=5 // pred_fallthru
        _
    $region6: #{tpu_custom_call.1} parent=1 // loop_footer
      %s21 = sadd.s32 1, %s17
    $region7: #{tpu_custom_call.1} parent=1 // loop_footer_branch
      %16 = sbr.rel target = $region3
    $region8: #{tpu_custom_call.1} parent=1 // loop_exit
      _
    %1019 = vsyncpa [#allocation5], 1
    %s1020 = scalar_lea.sflag [#allocation5], 1
    %1021 = vsyncpa %s1020, 1
    %1022 = vsyncpa [#allocation8], 1
    %s1023 = scalar_lea.sflag [#allocation8], 1
    %1024 = vsyncpa %s1023, 1
    %1025 = vsyncpa [#allocation6], 1
    %s1026 = scalar_lea.sflag [#allocation6], 1
    %1027 = vsyncpa %s1026, 1

</llo_original>
